<compile_context>
chip_gen: v6e
topology: v6e:2x2x1
jax: 0.10.0
libtpu: 0.0.40
codegen_flags: <defaults>
</compile_context>

<pallas_src>
import jax
import jax.numpy as jnp
from jax.experimental import pallas as pl
from jax.experimental.pallas import tpu as pltpu

EPS = 1e-5


def conv_gemm_relu_bn_kernel(col_ref, w_ref, b_ref, out_ref):
    """Fused conv-as-GEMM + bias + ReLU + BatchNorm (training batch stats).

    col_ref: (K, M)    f32 VMEM  im2col of padded input, K = Cin*27, M = N*D*H*W
    w_ref:   (Cout, K) f32 VMEM  conv weights (torch OIDHW flattened over I,kd,kh,kw)
    b_ref:   (Cout, 1) f32 VMEM  conv bias
    out_ref: (Cout, M) f32 VMEM  lane-dense output (spatial on the lane axis)
    """
    # 3x3x3 conv == one MXU GEMM over the im2col matrix (f32 accumulation).
    y = jnp.dot(w_ref[...], col_ref[...], preferred_element_type=jnp.float32)
    # Bias + ReLU fused into the epilogue (no per-channel full-tile bias splat).
    y = jnp.maximum(y + b_ref[...], 0.0)
    # BatchNorm3d (training): per-channel biased stats over (N, D, H, W) = axis -1.
    # Single pass: accumulate E[x] and E[x^2] together; var = E[x^2] - mean^2.
    inv_m = 1.0 / y.shape[1]
    mean = jnp.sum(y, axis=1, keepdims=True) * inv_m
    ex2 = jnp.sum(y * y, axis=1, keepdims=True) * inv_m
    var = ex2 - mean * mean
    out_ref[...] = (y - mean) * jax.lax.rsqrt(var + EPS)


def _im2col_3x3x3(xc):
    """xc: (C, N, D, H, W) -> (C*27, N*D*H*W).

    Row index k = ci*27 + kd*9 + kh*3 + kw, matching torch (O, I, kd, kh, kw)
    weights flattened to (Cout, Cin*27).  Column index m = ((n*D+d)*H+h)*W+w.
    """
    c, n, d, h, w = xc.shape
    xp = jnp.pad(xc, ((0, 0), (0, 0), (1, 1), (1, 1), (1, 1)))
    taps = [xp[:, :, kd:kd + d, kh:kh + h, kw:kw + w]
            for kd in range(3) for kh in range(3) for kw in range(3)]
    col = jnp.stack(taps, axis=1)                 # (C, 27, N, D, H, W)
    return col.reshape(c * 27, n * d * h * w)


def conv3d_relu_bn(xc, w, b):
    """xc: (Cin, N, D, H, W); w: (Cout, Cin, 3, 3, 3); b: (Cout,) -> (Cout, N*D*H*W)."""
    cin, n, d, h, wd = xc.shape
    cout = w.shape[0]
    m = n * d * h * wd
    col = _im2col_3x3x3(xc.astype(jnp.float32))                 # (K, M)
    w2d = w.reshape(cout, cin * 27).astype(jnp.float32)         # (Cout, K)
    b2d = b.reshape(cout, 1).astype(jnp.float32)                # (Cout, 1)
    return pl.pallas_call(
        conv_gemm_relu_bn_kernel,
        out_shape=jax.ShapeDtypeStruct((cout, m), jnp.float32),
        in_specs=[
            pl.BlockSpec(memory_space=pltpu.MemorySpace.VMEM),  # im2col tile
            pl.BlockSpec(memory_space=pltpu.MemorySpace.VMEM),  # weights
            pl.BlockSpec(memory_space=pltpu.MemorySpace.VMEM),  # bias
        ],
        out_specs=pl.BlockSpec(memory_space=pltpu.MemorySpace.VMEM),
    )(col, w2d, b2d)


@jax.jit
def block_forward(x_ncdhw, w1, b1, w2, b2):
    """Forward pass of `Block`. x_ncdhw: (N, Cin, D, H, W) float32."""
    n, cin, d, h, w = x_ncdhw.shape
    cout = w1.shape[0]
    xc = jnp.transpose(x_ncdhw, (1, 0, 2, 3, 4))               # (Cin, N, D, H, W)
    y1 = conv3d_relu_bn(xc, w1, b1).reshape(cout, n, d, h, w)  # BN(ReLU(conv1(x)))
    y2 = conv3d_relu_bn(y1, w2, b2).reshape(cout, n, d, h, w)  # BN(ReLU(conv2(.)))
    return jnp.transpose(y2, (1, 0, 2, 3, 4))                  # (N, Cout, D, H, W)


def reference_forward(x, w1, b1, w2, b2):
    """Pure-JAX (XLA) reference for the same forward pass."""
    def conv(x, w, b):
        y = jax.lax.conv_general_dilated(
            x, w, window_strides=(1, 1, 1),
            padding=((1, 1), (1, 1), (1, 1)),
            dimension_numbers=("NCDHW", "OIDHW", "NCDHW"))
        return y + b[None, :, None, None, None]

    def bn(a):
        m = jnp.mean(a, axis=(0, 2, 3, 4), keepdims=True)
        v = jnp.mean((a - m) ** 2, axis=(0, 2, 3, 4), keepdims=True)
        return (a - m) * jax.lax.rsqrt(v + EPS)

    a1 = bn(jnp.maximum(conv(x, w1, b1), 0.0))
    return bn(jnp.maximum(conv(a1, w2, b2), 0.0))


if __name__ == "__main__":
    # Small shapes consistent with the module: Conv3d(in_ch, out_ch, k=3, pad=1).
    # N*D*H*W = 2*4*4*4 = 128 -> the kernel's lane axis is exactly full.
    N, IN_CH, OUT_CH = 2, 2, 4
    D = H = W = 4

    key = jax.random.PRNGKey(0)
    kx, kw1, kb1, kw2, kb2 = jax.random.split(key, 5)

    x = jax.random.normal(kx, (N, IN_CH, D, H, W), dtype=jnp.float32)
    # Synthetic parameters in torch Conv3d weight layout (O, I, kd, kh, kw).
    w1 = 0.2 * jax.random.normal(kw1, (OUT_CH, IN_CH, 3, 3, 3), dtype=jnp.float32)
    b1 = 0.1 * jax.random.normal(kb1, (OUT_CH,), dtype=jnp.float32)
    w2 = 0.2 * jax.random.normal(kw2, (OUT_CH, OUT_CH, 3, 3, 3), dtype=jnp.float32)
    b2 = 0.1 * jax.random.normal(kb2, (OUT_CH,), dtype=jnp.float32)

    out = jax.block_until_ready(block_forward(x, w1, b1, w2, b2))
    ref = jax.block_until_ready(reference_forward(x, w1, b1, w2, b2))

    assert out.shape == (N, OUT_CH, D, H, W), out.shape
    max_err = float(jnp.max(jnp.abs(out - ref)))
    assert jnp.allclose(out, ref, atol=1e-3, rtol=1e-3), max_err

    print("KERNEL_OK")
</pallas_src>

<mosaic_0001>
module attributes {stable_mosaic.version = 11 : i64} {
  func.func @conv_gemm_relu_bn_kernel(%arg0: memref<54x128xf32, #tpu.memory_space<vmem>>, %arg1: memref<4x54xf32, #tpu.memory_space<vmem>>, %arg2: memref<4x1xf32, #tpu.memory_space<vmem>>, %arg3: memref<4x128xf32, #tpu.memory_space<vmem>>) attributes {dimension_semantics = [], scalar_prefetch = 0 : i64, scratch_operands = 0 : i64, tpu.core_type = #tpu.core_type<tc>} {
    %c0 = arith.constant 0 : index
    %c0_0 = arith.constant 0 : index
    %0 = vector.load %arg1[%c0, %c0_0] : memref<4x54xf32, #tpu.memory_space<vmem>>, vector<4x54xf32>
    %c0_1 = arith.constant 0 : index
    %c0_2 = arith.constant 0 : index
    %1 = vector.load %arg0[%c0_1, %c0_2] : memref<54x128xf32, #tpu.memory_space<vmem>>, vector<54x128xf32>
    %cst = arith.constant dense<0.000000e+00> : vector<4x128xf32>
    %2 = tpu.matmul %0, %1, %cst {dimension_numbers = #tpu.dot_dimension_numbers<[1], [0], [0], [1], [0, 0, 1, 1], [], []>} : vector<4x54xf32>, vector<54x128xf32>, vector<4x128xf32> -> vector<4x128xf32>
    %c0_3 = arith.constant 0 : index
    %c0_4 = arith.constant 0 : index
    %3 = vector.load %arg2[%c0_3, %c0_4] : memref<4x1xf32, #tpu.memory_space<vmem>>, vector<4x1xf32>
    %4 = vector.broadcast %3 : vector<4x1xf32> to vector<4x128xf32>
    %5 = arith.addf %2, %4 : vector<4x128xf32>
    %cst_5 = arith.constant 0.000000e+00 : f32
    %6 = vector.broadcast %cst_5 : f32 to vector<4x128xf32>
    %7 = arith.maximumf %5, %6 : vector<4x128xf32>
    %cst_6 = arith.constant dense<0.000000e+00> : vector<4xf32>
    %8 = vector.multi_reduction <add>, %7, %cst_6 [1] : vector<4x128xf32> to vector<4xf32>
    %9 = vector.shape_cast %8 : vector<4xf32> to vector<4x1xf32>
    %cst_7 = arith.constant 7.812500e-03 : f32
    %10 = vector.broadcast %cst_7 : f32 to vector<4x1xf32>
    %11 = arith.mulf %9, %10 : vector<4x1xf32>
    %12 = arith.mulf %7, %7 : vector<4x128xf32>
    %cst_8 = arith.constant dense<0.000000e+00> : vector<4xf32>
    %13 = vector.multi_reduction <add>, %12, %cst_8 [1] : vector<4x128xf32> to vector<4xf32>
    %14 = vector.shape_cast %13 : vector<4xf32> to vector<4x1xf32>
    %cst_9 = arith.constant 7.812500e-03 : f32
    %15 = vector.broadcast %cst_9 : f32 to vector<4x1xf32>
    %16 = arith.mulf %14, %15 : vector<4x1xf32>
    %17 = arith.mulf %11, %11 : vector<4x1xf32>
    %18 = arith.subf %16, %17 : vector<4x1xf32>
    %19 = vector.broadcast %11 : vector<4x1xf32> to vector<4x128xf32>
    %20 = arith.subf %7, %19 : vector<4x128xf32>
    %cst_10 = arith.constant 9.99999974E-6 : f32
    %21 = vector.broadcast %cst_10 : f32 to vector<4x1xf32>
    %22 = arith.addf %18, %21 : vector<4x1xf32>
    %23 = math.rsqrt %22 : vector<4x1xf32>
    %24 = vector.broadcast %23 : vector<4x1xf32> to vector<4x128xf32>
    %25 = arith.mulf %20, %24 : vector<4x128xf32>
    %c0_11 = arith.constant 0 : index
    %c0_12 = arith.constant 0 : index
    %26 = vector.load %arg3[%c0_11, %c0_12] : memref<4x128xf32, #tpu.memory_space<vmem>>, vector<4x128xf32>
    tpu.vector_store %arg3[%c0_11, %c0_12], %25 {strides = array<i32>} : memref<4x128xf32, #tpu.memory_space<vmem>>, vector<4x128xf32>,
    return
  }
}

module attributes {stable_mosaic.version = 11 : i64} {
  func.func @conv_gemm_relu_bn_kernel(%arg0: memref<108x128xf32, #tpu.memory_space<vmem>>, %arg1: memref<4x108xf32, #tpu.memory_space<vmem>>, %arg2: memref<4x1xf32, #tpu.memory_space<vmem>>, %arg3: memref<4x128xf32, #tpu.memory_space<vmem>>) attributes {dimension_semantics = [], scalar_prefetch = 0 : i64, scratch_operands = 0 : i64, tpu.core_type = #tpu.core_type<tc>} {
    %c0 = arith.constant 0 : index
    %c0_0 = arith.constant 0 : index
    %0 = vector.load %arg1[%c0, %c0_0] : memref<4x108xf32, #tpu.memory_space<vmem>>, vector<4x108xf32>
    %c0_1 = arith.constant 0 : index
    %c0_2 = arith.constant 0 : index
    %1 = vector.load %arg0[%c0_1, %c0_2] : memref<108x128xf32, #tpu.memory_space<vmem>>, vector<108x128xf32>
    %cst = arith.constant dense<0.000000e+00> : vector<4x128xf32>
    %2 = tpu.matmul %0, %1, %cst {dimension_numbers = #tpu.dot_dimension_numbers<[1], [0], [0], [1], [0, 0, 1, 1], [], []>} : vector<4x108xf32>, vector<108x128xf32>, vector<4x128xf32> -> vector<4x128xf32>
    %c0_3 = arith.constant 0 : index
    %c0_4 = arith.constant 0 : index
    %3 = vector.load %arg2[%c0_3, %c0_4] : memref<4x1xf32, #tpu.memory_space<vmem>>, vector<4x1xf32>
    %4 = vector.broadcast %3 : vector<4x1xf32> to vector<4x128xf32>
    %5 = arith.addf %2, %4 : vector<4x128xf32>
    %cst_5 = arith.constant 0.000000e+00 : f32
    %6 = vector.broadcast %cst_5 : f32 to vector<4x128xf32>
    %7 = arith.maximumf %5, %6 : vector<4x128xf32>
    %cst_6 = arith.constant dense<0.000000e+00> : vector<4xf32>
    %8 = vector.multi_reduction <add>, %7, %cst_6 [1] : vector<4x128xf32> to vector<4xf32>
    %9 = vector.shape_cast %8 : vector<4xf32> to vector<4x1xf32>
    %cst_7 = arith.constant 7.812500e-03 : f32
    %10 = vector.broadcast %cst_7 : f32 to vector<4x1xf32>
    %11 = arith.mulf %9, %10 : vector<4x1xf32>
    %12 = arith.mulf %7, %7 : vector<4x128xf32>
    %cst_8 = arith.constant dense<0.000000e+00> : vector<4xf32>
    %13 = vector.multi_reduction <add>, %12, %cst_8 [1] : vector<4x128xf32> to vector<4xf32>
    %14 = vector.shape_cast %13 : vector<4xf32> to vector<4x1xf32>
    %cst_9 = arith.constant 7.812500e-03 : f32
    %15 = vector.broadcast %cst_9 : f32 to vector<4x1xf32>
    %16 = arith.mulf %14, %15 : vector<4x1xf32>
    %17 = arith.mulf %11, %11 : vector<4x1xf32>
    %18 = arith.subf %16, %17 : vector<4x1xf32>
    %19 = vector.broadcast %11 : vector<4x1xf32> to vector<4x128xf32>
    %20 = arith.subf %7, %19 : vector<4x128xf32>
    %cst_10 = arith.constant 9.99999974E-6 : f32
    %21 = vector.broadcast %cst_10 : f32 to vector<4x1xf32>
    %22 = arith.addf %18, %21 : vector<4x1xf32>
    %23 = math.rsqrt %22 : vector<4x1xf32>
    %24 = vector.broadcast %23 : vector<4x1xf32> to vector<4x128xf32>
    %25 = arith.mulf %20, %24 : vector<4x128xf32>
    %c0_11 = arith.constant 0 : index
    %c0_12 = arith.constant 0 : index
    %26 = vector.load %arg3[%c0_11, %c0_12] : memref<4x128xf32, #tpu.memory_space<vmem>>, vector<4x128xf32>
    tpu.vector_store %arg3[%c0_11, %c0_12], %25 {strides = array<i32>} : memref<4x128xf32, #tpu.memory_space<vmem>>, vector<4x128xf32>,
    return
  }
}

</mosaic_0001>

<llo_original>
// kernel: block_forward.2
$region0: #{block_forward.2}
  #allocation0 [shape = 'u32[]', space=smem, size = 0x4, offset = 0x4, fixed_abs, tag = 'smem constant byte address 0x4 - core index']
  #allocation1 [shape = 'u32[144,128]{1,0:T(1,128)}', space=vmem, size = 0x12000, scoped, tag = 'internal scratch']
  %s0 = inlined_call_operand.vmem [shape: f32[54,128], index: 0, kind: input, shape index: {}]
  %s1 = inlined_call_operand.vmem [shape: f32[4,54], index: 1, kind: input, shape index: {}]
  %s2 = inlined_call_operand.vmem [shape: f32[4,1], index: 2, kind: input, shape index: {}]
  %s3 = inlined_call_operand.vmem [shape: f32[4,128], index: 3, kind: output, shape index: {}]
  %s4 = sld [smem:[#allocation0]]
  $region22: #{block_forward.2} parent=0
    _
  %s6 = ssub.s32 1, %s4
  %s7 = scalar_select 0, %s6, %s4
  // Predicated region
  $region2: #{block_forward.2} parent=0 // pred_check
    _
  $region3: #{block_forward.2} parent=0 // pred_check_branch
    %9 = sbr.rel (0) target = $region5
  $region4: #{block_forward.2} parent=0 // pred_region
    _
  $region5: #{block_forward.2} parent=0 // pred_fallthru
    _
  // Predicated region
  $region6: #{block_forward.2} parent=0 // pred_check
    _
  $region7: #{block_forward.2} parent=0 // pred_check_branch
    %11 = sbr.rel (0) target = $region9
  $region8: #{block_forward.2} parent=0 // pred_region
    _
  $region9: #{block_forward.2} parent=0 // pred_fallthru
    _
  // Predicated region
  $region10: #{block_forward.2} parent=0 // pred_check
    _
  $region11: #{block_forward.2} parent=0 // pred_check_branch
    %13 = sbr.rel (0) target = $region13
  $region12: #{block_forward.2} parent=0 // pred_region
    _
  $region13: #{block_forward.2} parent=0 // pred_fallthru
    _
  %v14 = vld [vmem:[%s1] sm:$0xf]
  %v15 = vld [vmem:[%s0] sm:$0xff]
  %v16 = vld [vmem:[%s0 + $0x8] sm:$0xff]
  %v17 = vld [vmem:[%s0 + $0x10] sm:$0xff]
  %v18 = vld [vmem:[%s0 + $0x18] sm:$0xff]
  %v19 = vld [vmem:[%s0 + $0x20] sm:$0xff]
  %v20 = vld [vmem:[%s0 + $0x28] sm:$0xff]
  %v21 = vld [vmem:[%s0 + $0x30] sm:$0x3f]
  %v22 = vld [vmem:[%s2] sm:$0xf]
  %24 = vset.pattern.permute.xlu0 0
  %25 = vperm.xlu0 %24, %v22
  %v26 = vpop.permute.xlu0 %25
  %vm28 = vcmask 441344
  %v30 = vsel %vm28, %v14, 0
  %vm32 = vcmask 1045504
  %v34 = vsel %vm32, %v21, 0
  %36 = vmatprep.subr.mxu0 0.0
  %37 = vmatpush1.msra.mxu0 0.0
  %38 = vmatprep.subr.mxu0 0.0
  %39 = vmatpush1.msra.mxu0 0.0
  %40 = vmatprep.subr.mxu0 0.0
  %41 = vmatpush1.msra.mxu0 0.0
  %42 = vmatprep.subr.mxu0 0.0
  %43 = vmatpush1.msra.mxu0 0.0
  %44 = vmatprep.subr.mxu0 0.0
  %45 = vmatpush1.msra.mxu0 0.0
  %46 = vmatprep.subr.mxu0 0.0
  %47 = vmatpush1.msra.mxu0 0.0
  %48 = vmatprep.subr.mxu0 0.0
  %49 = vmatpush1.msra.mxu0 0.0
  %50 = vmatprep.subr.mxu0 0.0
  %51 = vmatpush1.msra.mxu0 0.0
  %52 = vmatprep.subr.mxu0 0.0
  %53 = vmatpush1.msra.mxu0 0.0
  %54 = vmatprep.subr.mxu0 0.0
  %55 = vmatpush1.msra.mxu0 %v34
  %56 = vmatprep.subr.mxu0 0.0
  %57 = vmatpush1.msra.mxu0 %v20
  %58 = vmatprep.subr.mxu0 0.0
  %59 = vmatpush1.msra.mxu0 %v19
  %60 = vmatprep.subr.mxu0 0.0
  %61 = vmatpush1.msra.mxu0 %v18
  %62 = vmatprep.subr.mxu0 0.0
  %63 = vmatpush1.msra.mxu0 %v17
  %64 = vmatprep.subr.mxu0 0.0
  %65 = vmatpush1.msra.mxu0 %v16
  %66 = vmatprep.subr.mxu0 0.0
  %67 = vmatpush1.msra.mxu0 %v15
  %68 = vmatprep.subr.mxu0 0.0
  %69 = vmatpush2.msra.mxu0 0.0
  %70 = vmatprep.subr.mxu0 0.0
  %71 = vmatpush2.msra.mxu0 0.0
  %72 = vmatprep.subr.mxu0 0.0
  %73 = vmatpush2.msra.mxu0 0.0
  %74 = vmatprep.subr.mxu0 0.0
  %75 = vmatpush2.msra.mxu0 0.0
  %76 = vmatprep.subr.mxu0 0.0
  %77 = vmatpush2.msra.mxu0 0.0
  %78 = vmatprep.subr.mxu0 0.0
  %79 = vmatpush2.msra.mxu0 0.0
  %80 = vmatprep.subr.mxu0 0.0
  %81 = vmatpush2.msra.mxu0 0.0
  %82 = vmatprep.subr.mxu0 0.0
  %83 = vmatpush2.msra.mxu0 0.0
  %84 = vmatprep.subr.mxu0 0.0
  %85 = vmatpush2.msra.mxu0 0.0
  %86 = vmatprep.subr.mxu0 0.0
  %87 = vmatpush2.msra.mxu0 0.0
  %88 = vmatprep.subr.mxu0 0.0
  %89 = vmatpush2.msra.mxu0 0.0
  %90 = vmatprep.subr.mxu0 0.0
  %91 = vmatpush2.msra.mxu0 0.0
  %92 = vmatprep.subr.mxu0 0.0
  %93 = vmatpush2.msra.mxu0 0.0
  %94 = vmatprep.subr.mxu0 0.0
  %95 = vmatpush2.msra.mxu0 0.0
  %96 = vmatprep.subr.mxu0 0.0
  %97 = vmatpush2.msra.mxu0 0.0
  %98 = vmatprep.subr.mxu0 0.0
  %99 = vmatpush2.msra.mxu0 0.0
  %100 = vmatprep.mubr.f32.mxu0 0.0
  %101 = vmatmul.mubr.f32.gmra.mxu0 %v30
  %v102 = vpop.f32.mrf.mxu0
  %v103 = vadd.f32 %v26, %v102
  %v104 = vpop.f32.mrf.mxu0
  %105 = vdwg.mxu0
  %v106 = vmax.f32 %v103, 0.0
  %vm107 = vcmask 1043456
  %v108 = vsel %vm107, %v106, 0.0
  %109 = vadd.xlane.f32.xlu0 %v108
  %v110 = vpop.xlane.xlu0 %109
  %v111 = vmul.f32 %v110, 0.0078125
  %v112 = vmul.f32 %v106, %v106
  %v113 = vsel %vm107, %v112, 0.0
  %114 = vadd.xlane.f32.xlu0 %v113
  %v115 = vpop.xlane.xlu0 %114
  %v116 = vmul.f32 %v115, 0.0078125
  %v117 = vmul.f32 %v111, %v111
  %v118 = vsub.f32 %v116, %v117
  %v119 = vsub.f32 %v106, %v111
  %v120 = vadd.f32 %v118, 1e-05
  %v121 = vrsqrt.pop %v120
  %v122 = vmul.f32 %v119, %v121
  %123 = vst [vmem:[%s3] sm:$0xf] %v122
  // Predicated region
  $region14: #{block_forward.2} parent=0 // pred_check
    _
  $region15: #{block_forward.2} parent=0 // pred_check_branch
    %125 = sbr.rel (0) target = $region17
  $region16: #{block_forward.2} parent=0 // pred_region
    _
  $region17: #{block_forward.2} parent=0 // pred_fallthru
    _
  // Predicated region
  $region18: #{block_forward.2} parent=0 // pred_check
    _
  $region19: #{block_forward.2} parent=0 // pred_check_branch
    %127 = sbr.rel (0) target = $region21
  $region20: #{block_forward.2} parent=0 // pred_region
    _
  $region21: #{block_forward.2} parent=0 // pred_fallthru
    _

// kernel: block_forward.3
$region0: #{block_forward.3}
  #allocation0 [shape = 'u32[]', space=smem, size = 0x4, offset = 0x4, fixed_abs, tag = 'smem constant byte address 0x4 - core index']
  #allocation1 [shape = 'u32[144,128]{1,0:T(1,128)}', space=vmem, size = 0x12000, scoped, tag = 'internal scratch']
  %s0 = inlined_call_operand.vmem [shape: f32[108,128], index: 0, kind: input, shape index: {}]
  %s1 = inlined_call_operand.vmem [shape: f32[4,108], index: 1, kind: input, shape index: {}]
  %s2 = inlined_call_operand.vmem [shape: f32[4,1], index: 2, kind: input, shape index: {}]
  %s3 = inlined_call_operand.vmem [shape: f32[4,128], index: 3, kind: output, shape index: {}]
  %s4 = sld [smem:[#allocation0]]
  $region22: #{block_forward.3} parent=0
    _
  %s6 = ssub.s32 1, %s4
  %s7 = scalar_select 0, %s6, %s4
  // Predicated region
  $region2: #{block_forward.3} parent=0 // pred_check
    _
  $region3: #{block_forward.3} parent=0 // pred_check_branch
    %9 = sbr.rel (0) target = $region5
  $region4: #{block_forward.3} parent=0 // pred_region
    _
  $region5: #{block_forward.3} parent=0 // pred_fallthru
    _
  // Predicated region
  $region6: #{block_forward.3} parent=0 // pred_check
    _
  $region7: #{block_forward.3} parent=0 // pred_check_branch
    %11 = sbr.rel (0) target = $region9
  $region8: #{block_forward.3} parent=0 // pred_region
    _
  $region9: #{block_forward.3} parent=0 // pred_fallthru
    _
  // Predicated region
  $region10: #{block_forward.3} parent=0 // pred_check
    _
  $region11: #{block_forward.3} parent=0 // pred_check_branch
    %13 = sbr.rel (0) target = $region13
  $region12: #{block_forward.3} parent=0 // pred_region
    _
  $region13: #{block_forward.3} parent=0 // pred_fallthru
    _
  %v14 = vld [vmem:[%s1] sm:$0xf]
  %v15 = vld [vmem:[%s0] sm:$0xff]
  %v16 = vld [vmem:[%s0 + $0x8] sm:$0xff]
  %v17 = vld [vmem:[%s0 + $0x10] sm:$0xff]
  %v18 = vld [vmem:[%s0 + $0x18] sm:$0xff]
  %v19 = vld [vmem:[%s0 + $0x20] sm:$0xff]
  %v20 = vld [vmem:[%s0 + $0x28] sm:$0xff]
  %v21 = vld [vmem:[%s0 + $0x30] sm:$0xff]
  %v22 = vld [vmem:[%s0 + $0x38] sm:$0xff]
  %v23 = vld [vmem:[%s0 + $0x40] sm:$0xff]
  %v24 = vld [vmem:[%s0 + $0x48] sm:$0xff]
  %v25 = vld [vmem:[%s0 + $0x50] sm:$0xff]
  %v26 = vld [vmem:[%s0 + $0x58] sm:$0xff]
  %v27 = vld [vmem:[%s0 + $0x60] sm:$0xff]
  %v28 = vld [vmem:[%s0 + $0x68] sm:$0xf]
  %v29 = vld [vmem:[%s2] sm:$0xf]
  %31 = vset.pattern.permute.xlu0 0
  %32 = vperm.xlu0 %31, %v29
  %v33 = vpop.permute.xlu0 %32
  %vm35 = vcmask 883712
  %v37 = vsel %vm35, %v14, 0
  %vm39 = vcmask 1043456
  %v41 = vsel %vm39, %v28, 0
  %43 = vmatprep.subr.mxu0 0.0
  %44 = vmatpush1.msra.mxu0 0.0
  %45 = vmatprep.subr.mxu0 0.0
  %46 = vmatpush1.msra.mxu0 0.0
  %47 = vmatprep.subr.mxu0 0.0
  %48 = vmatpush1.msra.mxu0 %v41
  %49 = vmatprep.subr.mxu0 0.0
  %50 = vmatpush1.msra.mxu0 %v27
  %51 = vmatprep.subr.mxu0 0.0
  %52 = vmatpush1.msra.mxu0 %v26
  %53 = vmatprep.subr.mxu0 0.0
  %54 = vmatpush1.msra.mxu0 %v25
  %55 = vmatprep.subr.mxu0 0.0
  %56 = vmatpush1.msra.mxu0 %v24
  %57 = vmatprep.subr.mxu0 0.0
  %58 = vmatpush1.msra.mxu0 %v23
  %59 = vmatprep.subr.mxu0 0.0
  %60 = vmatpush1.msra.mxu0 %v22
  %61 = vmatprep.subr.mxu0 0.0
  %62 = vmatpush1.msra.mxu0 %v21
  %63 = vmatprep.subr.mxu0 0.0
  %64 = vmatpush1.msra.mxu0 %v20
  %65 = vmatprep.subr.mxu0 0.0
  %66 = vmatpush1.msra.mxu0 %v19
  %67 = vmatprep.subr.mxu0 0.0
  %68 = vmatpush1.msra.mxu0 %v18
  %69 = vmatprep.subr.mxu0 0.0
  %70 = vmatpush1.msra.mxu0 %v17
  %71 = vmatprep.subr.mxu0 0.0
  %72 = vmatpush1.msra.mxu0 %v16
  %73 = vmatprep.subr.mxu0 0.0
  %74 = vmatpush1.msra.mxu0 %v15
  %75 = vmatprep.subr.mxu0 0.0
  %76 = vmatpush2.msra.mxu0 0.0
  %77 = vmatprep.subr.mxu0 0.0
  %78 = vmatpush2.msra.mxu0 0.0
  %79 = vmatprep.subr.mxu0 0.0
  %80 = vmatpush2.msra.mxu0 0.0
  %81 = vmatprep.subr.mxu0 0.0
  %82 = vmatpush2.msra.mxu0 0.0
  %83 = vmatprep.subr.mxu0 0.0
  %84 = vmatpush2.msra.mxu0 0.0
  %85 = vmatprep.subr.mxu0 0.0
  %86 = vmatpush2.msra.mxu0 0.0
  %87 = vmatprep.subr.mxu0 0.0
  %88 = vmatpush2.msra.mxu0 0.0
  %89 = vmatprep.subr.mxu0 0.0
  %90 = vmatpush2.msra.mxu0 0.0
  %91 = vmatprep.subr.mxu0 0.0
  %92 = vmatpush2.msra.mxu0 0.0
  %93 = vmatprep.subr.mxu0 0.0
  %94 = vmatpush2.msra.mxu0 0.0
  %95 = vmatprep.subr.mxu0 0.0
  %96 = vmatpush2.msra.mxu0 0.0
  %97 = vmatprep.subr.mxu0 0.0
  %98 = vmatpush2.msra.mxu0 0.0
  %99 = vmatprep.subr.mxu0 0.0
  %100 = vmatpush2.msra.mxu0 0.0
  %101 = vmatprep.subr.mxu0 0.0
  %102 = vmatpush2.msra.mxu0 0.0
  %103 = vmatprep.subr.mxu0 0.0
  %104 = vmatpush2.msra.mxu0 0.0
  %105 = vmatprep.subr.mxu0 0.0
  %106 = vmatpush2.msra.mxu0 0.0
  %107 = vmatprep.mubr.f32.mxu0 0.0
  %108 = vmatmul.mubr.f32.gmra.mxu0 %v37
  %v109 = vpop.f32.mrf.mxu0
  %v110 = vadd.f32 %v33, %v109
  %v111 = vpop.f32.mrf.mxu0
  %112 = vdwg.mxu0
  %v113 = vmax.f32 %v110, 0.0
  %v114 = vsel %vm39, %v113, 0.0
  %115 = vadd.xlane.f32.xlu0 %v114
  %v116 = vpop.xlane.xlu0 %115
  %v117 = vmul.f32 %v116, 0.0078125
  %v118 = vmul.f32 %v113, %v113
  %v119 = vsel %vm39, %v118, 0.0
  %120 = vadd.xlane.f32.xlu0 %v119
  %v121 = vpop.xlane.xlu0 %120
  %v122 = vmul.f32 %v121, 0.0078125
  %v123 = vmul.f32 %v117, %v117
  %v124 = vsub.f32 %v122, %v123
  %v125 = vsub.f32 %v113, %v117
  %v126 = vadd.f32 %v124, 1e-05
  %v127 = vrsqrt.pop %v126
  %v128 = vmul.f32 %v125, %v127
  %129 = vst [vmem:[%s3] sm:$0xf] %v128
  // Predicated region
  $region14: #{block_forward.3} parent=0 // pred_check
    _
  $region15: #{block_forward.3} parent=0 // pred_check_branch
    %131 = sbr.rel (0) target = $region17
  $region16: #{block_forward.3} parent=0 // pred_region
    _
  $region17: #{block_forward.3} parent=0 // pred_fallthru
    _
  // Predicated region
  $region18: #{block_forward.3} parent=0 // pred_check
    _
  $region19: #{block_forward.3} parent=0 // pred_check_branch
    %133 = sbr.rel (0) target = $region21
  $region20: #{block_forward.3} parent=0 // pred_region
    _
  $region21: #{block_forward.3} parent=0 // pred_fallthru
    _

</llo_original>
